<compile_context>
chip_gen: v7x
topology: tpu7x:2x2x1
jax: 0.10.0
libtpu: 0.0.40
codegen_flags: <defaults>
</compile_context>

<pallas_src>
import jax
import jax.numpy as jnp
from jax import lax
from jax.experimental import pallas as pl
from jax.experimental.pallas import tpu as pltpu


def _cpc_kernel(x_ref, y_ref, w_ref, b_ref, out_ref):
    # Everything fits in a single VMEM-resident invocation at these sizes.
    x = x_ref[...].astype(jnp.float32)          # (N, x_size)
    y = y_ref[...].astype(jnp.float32)          # (N, y_size)
    w = w_ref[...].astype(jnp.float32)          # (x_size, y_size)
    b = b_ref[...].astype(jnp.float32)          # (1, x_size)

    # Linear layer: x_pred = y @ W^T + b.  Transpose folded into dot_general
    # (contract y's dim 1 with w's dim 1) -> feeds the MXU with no XLU work.
    x_pred = lax.dot_general(
        y, w, dimension_numbers=(((1,), (1,)), ((), ())),
        preferred_element_type=jnp.float32) + b                   # (N, x_size)

    # Row-wise L2 normalization: rsqrt (EUP) + multiply, no divides.
    x_pred = x_pred * lax.rsqrt(
        jnp.sum(x_pred * x_pred, axis=-1, keepdims=True))
    xn = x * lax.rsqrt(jnp.sum(x * x, axis=-1, keepdims=True))

    # Pairwise cosine scores on the MXU; again contraction on last dims of
    # both operands so x_pred is never transposed.
    scores = lax.dot_general(
        xn, x_pred, dimension_numbers=(((1,), (1,)), ((), ())),
        preferred_element_type=jnp.float32)                       # (N, N)

    n = scores.shape[0]
    row = lax.broadcasted_iota(jnp.int32, (n, n), 0)
    col = lax.broadcasted_iota(jnp.int32, (n, n), 1)
    diag = (row == col).astype(jnp.float32)

    # pos_i = scores[i, i]
    pos = jnp.sum(scores * diag, axis=-1, keepdims=True)          # (N, 1)
    # Unstabilized logsumexp is safe: cosine similarities are bounded by |1|,
    # so exp(scores) <= e and cannot overflow in f32.
    neg = jnp.log(jnp.sum(jnp.exp(scores), axis=-1, keepdims=True))  # (N, 1)

    out_ref[0, 0] = jnp.mean(neg - pos)                           # scalar


def cpc_forward(x, y, w, b, average=True):
    """x: (N, x_size), y: (N, y_size), w: (x_size, y_size), b: (1, x_size)."""
    n = x.shape[0]
    out = pl.pallas_call(
        _cpc_kernel,
        out_shape=jax.ShapeDtypeStruct((1, 1), jnp.float32),
        # No grid: single invocation, whole (tiny) operands land in VMEM.
        in_specs=[
            pl.BlockSpec(memory_space=pltpu.MemorySpace.VMEM),
            pl.BlockSpec(memory_space=pltpu.MemorySpace.VMEM),
            pl.BlockSpec(memory_space=pltpu.MemorySpace.VMEM),
            pl.BlockSpec(memory_space=pltpu.MemorySpace.VMEM),
        ],
        # Scalar result goes out through SMEM (no lane-sparse masked vst).
        out_specs=pl.BlockSpec(memory_space=pltpu.MemorySpace.SMEM),
    )(x, y, w, b)
    mean_nce = out[0, 0]
    if average:
        return mean_nce
    # nce.sum() == nce.mean() * N
    return mean_nce * jnp.float32(n)


def _reference(x, y, w, b, average=True):
    # Pure-JAX reference mirroring the PyTorch forward.
    x_pred = y @ w.T + b
    x_pred = x_pred / jnp.linalg.norm(x_pred, axis=1, keepdims=True)
    xn = x / jnp.linalg.norm(x, axis=1, keepdims=True)
    pos = jnp.sum(xn * x_pred, axis=-1)
    neg = jax.scipy.special.logsumexp(xn @ x_pred.T, axis=-1)
    nce = -(pos - neg)
    return nce.mean() if average else nce.sum()


if __name__ == "__main__":
    key = jax.random.PRNGKey(0)
    k_x, k_y, k_w, k_b = jax.random.split(key, 4)

    batch = 8
    x_size = 32   # embedding size of modality x
    y_size = 32   # embedding size of modality y

    x = jax.random.normal(k_x, (batch, x_size), dtype=jnp.float32)
    y = jax.random.normal(k_y, (batch, y_size), dtype=jnp.float32)

    # Deterministic Linear(y_size -> x_size) params (PyTorch-style uniform init).
    bound = 1.0 / jnp.sqrt(jnp.float32(y_size))
    w = jax.random.uniform(k_w, (x_size, y_size), jnp.float32, -bound, bound)
    b = jax.random.uniform(k_b, (1, x_size), jnp.float32, -bound, bound)

    out = cpc_forward(x, y, w, b, average=True)
    out = jax.block_until_ready(out)

    ref = _reference(x, y, w, b, average=True)
    assert jnp.allclose(out, ref, rtol=1e-5, atol=1e-5), (out, ref)

    # Also check the sum (average=False) path.
    out_sum = jax.block_until_ready(cpc_forward(x, y, w, b, average=False))
    ref_sum = _reference(x, y, w, b, average=False)
    assert jnp.allclose(out_sum, ref_sum, rtol=1e-5, atol=1e-5), (out_sum, ref_sum)

    # TODO(synk): n_layers > 1 (Linear + Tanh stack) not exercised here; the
    # single-layer path is what the default module constructs.
    print("KERNEL_OK")
</pallas_src>

<mosaic_0001>
module attributes {stable_mosaic.version = 11 : i64} {
  func.func @_cpc_kernel(%arg0: memref<8x32xf32, #tpu.memory_space<vmem>>, %arg1: memref<8x32xf32, #tpu.memory_space<vmem>>, %arg2: memref<32x32xf32, #tpu.memory_space<vmem>>, %arg3: memref<1x32xf32, #tpu.memory_space<vmem>>, %arg4: memref<1x1xf32, #tpu.memory_space<smem>>) attributes {dimension_semantics = [], scalar_prefetch = 0 : i64, scratch_operands = 0 : i64, tpu.core_type = #tpu.core_type<tc>} {
    %c0 = arith.constant 0 : index
    %c0_0 = arith.constant 0 : index
    %0 = vector.load %arg0[%c0, %c0_0] : memref<8x32xf32, #tpu.memory_space<vmem>>, vector<8x32xf32>
    %c0_1 = arith.constant 0 : index
    %c0_2 = arith.constant 0 : index
    %1 = vector.load %arg1[%c0_1, %c0_2] : memref<8x32xf32, #tpu.memory_space<vmem>>, vector<8x32xf32>
    %c0_3 = arith.constant 0 : index
    %c0_4 = arith.constant 0 : index
    %2 = vector.load %arg2[%c0_3, %c0_4] : memref<32x32xf32, #tpu.memory_space<vmem>>, vector<32x32xf32>
    %c0_5 = arith.constant 0 : index
    %c0_6 = arith.constant 0 : index
    %3 = vector.load %arg3[%c0_5, %c0_6] : memref<1x32xf32, #tpu.memory_space<vmem>>, vector<1x32xf32>
    %cst = arith.constant dense<0.000000e+00> : vector<8x32xf32>
    %4 = tpu.matmul %1, %2, %cst {dimension_numbers = #tpu.dot_dimension_numbers<[1], [1], [0], [0], [0, 0, 1, 0], [], []>} : vector<8x32xf32>, vector<32x32xf32>, vector<8x32xf32> -> vector<8x32xf32>
    %5 = vector.broadcast %3 : vector<1x32xf32> to vector<8x32xf32>
    %6 = arith.addf %4, %5 : vector<8x32xf32>
    %7 = arith.mulf %6, %6 : vector<8x32xf32>
    %cst_7 = arith.constant dense<0.000000e+00> : vector<8xf32>
    %8 = vector.multi_reduction <add>, %7, %cst_7 [1] : vector<8x32xf32> to vector<8xf32>
    %9 = vector.shape_cast %8 : vector<8xf32> to vector<8x1xf32>
    %10 = math.rsqrt %9 : vector<8x1xf32>
    %11 = vector.broadcast %10 : vector<8x1xf32> to vector<8x32xf32>
    %12 = arith.mulf %6, %11 : vector<8x32xf32>
    %13 = arith.mulf %0, %0 : vector<8x32xf32>
    %cst_8 = arith.constant dense<0.000000e+00> : vector<8xf32>
    %14 = vector.multi_reduction <add>, %13, %cst_8 [1] : vector<8x32xf32> to vector<8xf32>
    %15 = vector.shape_cast %14 : vector<8xf32> to vector<8x1xf32>
    %16 = math.rsqrt %15 : vector<8x1xf32>
    %17 = vector.broadcast %16 : vector<8x1xf32> to vector<8x32xf32>
    %18 = arith.mulf %0, %17 : vector<8x32xf32>
    %cst_9 = arith.constant dense<0.000000e+00> : vector<8x8xf32>
    %19 = tpu.matmul %18, %12, %cst_9 {dimension_numbers = #tpu.dot_dimension_numbers<[1], [1], [0], [0], [0, 0, 1, 0], [], []>} : vector<8x32xf32>, vector<8x32xf32>, vector<8x8xf32> -> vector<8x8xf32>
    %20 = tpu.iota {dimensions = array<i32: 0>} : vector<8x8xi32>
    %21 = tpu.iota {dimensions = array<i32: 1>} : vector<8x8xi32>
    %22 = arith.cmpi eq, %20, %21 : vector<8x8xi32>
    %23 = arith.extui %22 : vector<8x8xi1> to vector<8x8xi32>
    %24 = arith.sitofp %23 : vector<8x8xi32> to vector<8x8xf32>
    %25 = arith.mulf %19, %24 : vector<8x8xf32>
    %cst_10 = arith.constant dense<0.000000e+00> : vector<8xf32>
    %26 = vector.multi_reduction <add>, %25, %cst_10 [1] : vector<8x8xf32> to vector<8xf32>
    %27 = vector.shape_cast %26 : vector<8xf32> to vector<8x1xf32>
    %28 = math.exp %19 : vector<8x8xf32>
    %cst_11 = arith.constant dense<0.000000e+00> : vector<8xf32>
    %29 = vector.multi_reduction <add>, %28, %cst_11 [1] : vector<8x8xf32> to vector<8xf32>
    %30 = vector.shape_cast %29 : vector<8xf32> to vector<8x1xf32>
    %31 = math.log %30 : vector<8x1xf32>
    %32 = arith.subf %31, %27 : vector<8x1xf32>
    %33 = vector.shape_cast %32 : vector<8x1xf32> to vector<1x8x1xf32>
    %cst_12 = arith.constant dense<0.000000e+00> : vector<1xf32>
    %34 = vector.multi_reduction <add>, %33, %cst_12 [1, 2] : vector<1x8x1xf32> to vector<1xf32>
    %35 = vector.shape_cast %34 : vector<1xf32> to vector<1x1x1xf32>
    %36 = vector.extract %35[0, 0, 0] : f32 from vector<1x1x1xf32>
    %cst_13 = arith.constant 8.000000e+00 : f32
    %37 = arith.divf %36, %cst_13 : f32
    %c0_14 = arith.constant 0 : index
    %c0_15 = arith.constant 0 : index
    %38 = memref.load %arg4[%c0_14, %c0_15] : memref<1x1xf32, #tpu.memory_space<smem>>
    memref.store %37, %arg4[%c0_14, %c0_15] : memref<1x1xf32, #tpu.memory_space<smem>>
    return
  }
}

</mosaic_0001>

<llo_original>
// kernel: tpu_custom_call.1
$region0: #{tpu_custom_call.1}
  #allocation0 [shape = 'u32[]', space=smem, size = 0x4, offset = 0x4, fixed_abs, tag = 'smem constant byte address 0x4 - core index']
  #allocation1 [shape = 'u32[144,128]{1,0:T(1,128)}', space=vmem, size = 0x12000, scoped, tag = 'internal scratch']
  %s0 = inlined_call_operand.hbm [shape: f32[8,32], index: 0, kind: input, shape index: {}]
  %s1 = inlined_call_operand.hbm [shape: f32[8,32], index: 1, kind: input, shape index: {}]
  %s2 = inlined_call_operand.hbm [shape: f32[32,32], index: 2, kind: input, shape index: {}]
  %s3 = inlined_call_operand.vmem [shape: f32[1,32], index: 3, kind: input, shape index: {}]
  %s4 = inlined_call_operand.hbm [shape: f32[1,1], index: 4, kind: output, shape index: {}]
  %s5 = sld [smem:[#allocation0]]
  $region38: #{tpu_custom_call.1} parent=0
    _
  %s7 = ssub.s32 1, %s5
  %s8 = scalar_select 0, %s7, %s5
  $region1: #{tpu_custom_call.1} parent=0
    #allocation2 [shape = 'u8[4096]{0}', space=vmem, size = 0x1000, scoped, tag = 'input window, operand 0, single buffered']
    #allocation3 [shape = 's32[1]{0}', space=sflag, size = 0x4, scoped, tag = 'scoped memory for tpu_custom_call.1']
    #allocation4 [shape = 's32[1]{0}', space=sflag, size = 0x4, scoped, tag = 'scoped memory for tpu_custom_call.1']
    #allocation5 [shape = 'u8[4096]{0}', space=vmem, size = 0x1000, scoped, tag = 'input window, operand 1, single buffered']
    #allocation6 [shape = 's32[1]{0}', space=sflag, size = 0x4, scoped, tag = 'scoped memory for tpu_custom_call.1']
    #allocation7 [shape = 'u8[16384]{0}', space=vmem, size = 0x4000, scoped, tag = 'input window, operand 2, single buffered']
    #allocation8 [shape = 'u8[512]{0}', space=smem, size = 0x200, scoped, tag = 'output window, operand 0, single buffered']
    %9 = vsyncpa [#allocation3], 0
    %10 = vsyncpa [#allocation6], 0
    %11 = vsyncpa [#allocation4], 0
    // Predicated region
    $region2: #{tpu_custom_call.1} parent=1 // pred_check
      _
    $region3: #{tpu_custom_call.1} parent=1 // pred_check_branch
      %13 = sbr.rel (0) target = $region5
    $region4: #{tpu_custom_call.1} parent=1 // pred_region
      %s15 = ssub.s32 128, 128
      %16 = vsyncadd [#allocation3], %s15
      %s18 = sshll.u32 [#allocation2], 4
      %s19 = int_to_ptr.vmem [resolvable:$true] %s18
      %21 = dma.hbm_to_vmem [thread:$0]  %s0, 128, %s19, [#allocation3]
    $region5: #{tpu_custom_call.1} parent=1 // pred_fallthru
      _
    // Predicated region
    $region6: #{tpu_custom_call.1} parent=1 // pred_check
      _
    $region7: #{tpu_custom_call.1} parent=1 // pred_check_branch
      %23 = sbr.rel (0) target = $region9
    $region8: #{tpu_custom_call.1} parent=1 // pred_region
      %s25 = ssub.s32 128, 128
      %26 = vsyncadd [#allocation6], %s25
      %s28 = sshll.u32 [#allocation5], 4
      %s29 = int_to_ptr.vmem [resolvable:$true] %s28
      %31 = dma.hbm_to_vmem [thread:$0]  %s1, 128, %s29, [#allocation6]
    $region9: #{tpu_custom_call.1} parent=1 // pred_fallthru
      _
    // Predicated region
    $region10: #{tpu_custom_call.1} parent=1 // pred_check
      _
    $region11: #{tpu_custom_call.1} parent=1 // pred_check_branch
      %33 = sbr.rel (0) target = $region13
    $region12: #{tpu_custom_call.1} parent=1 // pred_region
      %s35 = ssub.s32 512, 512
      %36 = vsyncadd [#allocation6], %s35
      %s37 = sshll.u32 [#allocation7], 4
      %s38 = int_to_ptr.vmem [resolvable:$true] %s37
      %43 = dma.hbm_to_vmem [thread:$0]  %s2, 512, %s38, [#allocation6], 128, 128, 8
    $region13: #{tpu_custom_call.1} parent=1 // pred_fallthru
      _
    // Predicated region
    $region14: #{tpu_custom_call.1} parent=1 // pred_check
      _
    $region15: #{tpu_custom_call.1} parent=1 // pred_check_branch
      %45 = sbr.rel (0) target = $region17
    $region16: #{tpu_custom_call.1} parent=1 // pred_region
      _
    $region17: #{tpu_custom_call.1} parent=1 // pred_fallthru
      _
    // Predicated region
    $region18: #{tpu_custom_call.1} parent=1 // pred_check
      _
    $region19: #{tpu_custom_call.1} parent=1 // pred_check_branch
      %47 = sbr.rel (0) target = $region21
    $region20: #{tpu_custom_call.1} parent=1 // pred_region
      %48 = dma.done [#allocation3], 128
    $region21: #{tpu_custom_call.1} parent=1 // pred_fallthru
      _
    // Predicated region
    $region22: #{tpu_custom_call.1} parent=1 // pred_check
      _
    $region23: #{tpu_custom_call.1} parent=1 // pred_check_branch
      %50 = sbr.rel (0) target = $region25
    $region24: #{tpu_custom_call.1} parent=1 // pred_region
      %51 = dma.done [#allocation6], 128
    $region25: #{tpu_custom_call.1} parent=1 // pred_fallthru
      _
    // Predicated region
    $region26: #{tpu_custom_call.1} parent=1 // pred_check
      _
    $region27: #{tpu_custom_call.1} parent=1 // pred_check_branch
      %53 = sbr.rel (0) target = $region29
    $region28: #{tpu_custom_call.1} parent=1 // pred_region
      %54 = dma.done [#allocation6], 512
    $region29: #{tpu_custom_call.1} parent=1 // pred_fallthru
      _
    %v55 = vld [vmem:[#allocation2] sm:$0xff]
    %v56 = vld [vmem:[#allocation5] sm:$0xff]
    %v57 = vld [vmem:[#allocation7] sm:$0xff]
    %v58 = vld [vmem:[#allocation7 + $0x8] sm:$0xff]
    %v59 = vld [vmem:[#allocation7 + $0x10] sm:$0xff]
    %v60 = vld [vmem:[#allocation7 + $0x18] sm:$0xff]
    %v61 = vld [vmem:[%s3] sm:$0x1]
    %v63 = vlaneseq
    %v64 = vshrl.u32 %v63, 7
    %v65 = vsub.s32 0, %v64
    %v66 = vrot.slane %v61, %v65
    %vm68 = vcmask 261120
    %v70 = vsel %vm68, %v56, 0
    %v73 = vsel %vm68, %v57, 0
    %v76 = vsel %vm68, %v58, 0
    %v79 = vsel %vm68, %v59, 0
    %v82 = vsel %vm68, %v60, 0
    %84 = vmatprep.subr.mxu0 0.0
    %85 = vmatpush1.xpose.msra.mxu0 %v73
    %86 = vmatprep.subr.mxu0 0.0
    %87 = vmatpush1.xpose.msra.mxu0 %v76
    %88 = vmatprep.subr.mxu0 0.0
    %89 = vmatpush1.xpose.msra.mxu0 %v79
    %90 = vmatprep.subr.mxu0 0.0
    %91 = vmatpush1.xpose.msra.mxu0 %v82
    %92 = vmatprep.subr.mxu0 0.0
    %93 = vmatpush1.xpose.msra.mxu0 0.0
    %94 = vmatprep.subr.mxu0 0.0
    %95 = vmatpush1.xpose.msra.mxu0 0.0
    %96 = vmatprep.subr.mxu0 0.0
    %97 = vmatpush1.xpose.msra.mxu0 0.0
    %98 = vmatprep.subr.mxu0 0.0
    %99 = vmatpush1.xpose.msra.mxu0 0.0
    %100 = vmatprep.subr.mxu0 0.0
    %101 = vmatpush1.xpose.msra.mxu0 0.0
    %102 = vmatprep.subr.mxu0 0.0
    %103 = vmatpush1.xpose.msra.mxu0 0.0
    %104 = vmatprep.subr.mxu0 0.0
    %105 = vmatpush1.xpose.msra.mxu0 0.0
    %106 = vmatprep.subr.mxu0 0.0
    %107 = vmatpush1.xpose.msra.mxu0 0.0
    %108 = vmatprep.subr.mxu0 0.0
    %109 = vmatpush1.xpose.msra.mxu0 0.0
    %110 = vmatprep.subr.mxu0 0.0
    %111 = vmatpush1.xpose.msra.mxu0 0.0
    %112 = vmatprep.subr.mxu0 0.0
    %113 = vmatpush1.xpose.msra.mxu0 0.0
    %114 = vmatprep.subr.mxu0 0.0
    %115 = vmatpush1.xpose.msra.mxu0 0.0
    %116 = vmatprep.subr.mxu0 0.0
    %117 = vmatpush1.xpose.msra.mxu0 0.0
    %118 = vmatprep.subr.mxu0 0.0
    %119 = vmatpush1.xpose.msra.mxu0 0.0
    %120 = vmatprep.subr.mxu0 0.0
    %121 = vmatpush1.xpose.msra.mxu0 0.0
    %122 = vmatprep.subr.mxu0 0.0
    %123 = vmatpush1.xpose.msra.mxu0 0.0
    %124 = vmatprep.subr.mxu0 0.0
    %125 = vmatpush1.xpose.msra.mxu0 0.0
    %126 = vmatprep.subr.mxu0 0.0
    %127 = vmatpush1.xpose.msra.mxu0 0.0
    %128 = vmatprep.subr.mxu0 0.0
    %129 = vmatpush1.xpose.msra.mxu0 0.0
    %130 = vmatprep.subr.mxu0 0.0
    %131 = vmatpush1.xpose.msra.mxu0 0.0
    %132 = vmatprep.subr.mxu0 0.0
    %133 = vmatpush1.xpose.msra.mxu0 0.0
    %134 = vmatprep.subr.mxu0 0.0
    %135 = vmatpush1.xpose.msra.mxu0 0.0
    %136 = vmatprep.subr.mxu0 0.0
    %137 = vmatpush1.xpose.msra.mxu0 0.0
    %138 = vmatprep.subr.mxu0 0.0
    %139 = vmatpush1.xpose.msra.mxu0 0.0
    %140 = vmatprep.subr.mxu0 0.0
    %141 = vmatpush1.xpose.msra.mxu0 0.0
    %142 = vmatprep.subr.mxu0 0.0
    %143 = vmatpush1.xpose.msra.mxu0 0.0
    %144 = vmatprep.subr.mxu0 0.0
    %145 = vmatpush1.xpose.msra.mxu0 0.0
    %146 = vmatprep.subr.mxu0 0.0
    %147 = vmatpush1.xpose.msra.mxu0 0.0
    %148 = vmatprep.mubr.f32.mxu0 0.0
    %149 = vmatmul.mubr.f32.gmra.mrb[0].mxu0 %v70
    %v150 = vpop.f32.mrb[0].mxu0
    %v151 = vadd.f32 %v66, %v150
    %v152 = vpop.f32.mrb[0].mxu0
    %153 = vdwg.mxu0
    %v154 = vmul.f32 %v151, %v151
    %v155 = vsel %vm68, %v154, 0.0
    %156 = vadd.xlane.f32.xlu0 %v155
    %v157 = vpop.xlane.xlu0 %156
    %v158 = vrsqrt.pop %v157
    %v159 = vmul.f32 %v151, %v158
    %v160 = vmul.f32 %v55, %v55
    %v161 = vsel %vm68, %v160, 0.0
    %162 = vadd.xlane.f32.xlu0 %v161
    %v163 = vpop.xlane.xlu0 %162
    %v164 = vrsqrt.pop %v163
    %v165 = vmul.f32 %v55, %v164
    %v167 = vsel %vm68, %v165, 0
    %v170 = vsel %vm68, %v159, 0
    %172 = vmatprep.subr.mxu0 0.0
    %173 = vmatpush1.xpose.msra.mxu0 %v170
    %174 = vmatprep.subr.mxu0 0.0
    %175 = vmatpush1.xpose.msra.mxu0 0.0
    %176 = vmatprep.subr.mxu0 0.0
    %177 = vmatpush1.xpose.msra.mxu0 0.0
    %178 = vmatprep.subr.mxu0 0.0
    %179 = vmatpush1.xpose.msra.mxu0 0.0
    %180 = vmatprep.subr.mxu0 0.0
    %181 = vmatpush1.xpose.msra.mxu0 0.0
    %182 = vmatprep.subr.mxu0 0.0
    %183 = vmatpush1.xpose.msra.mxu0 0.0
    %184 = vmatprep.subr.mxu0 0.0
    %185 = vmatpush1.xpose.msra.mxu0 0.0
    %186 = vmatprep.subr.mxu0 0.0
    %187 = vmatpush1.xpose.msra.mxu0 0.0
    %188 = vmatprep.subr.mxu0 0.0
    %189 = vmatpush1.xpose.msra.mxu0 0.0
    %190 = vmatprep.subr.mxu0 0.0
    %191 = vmatpush1.xpose.msra.mxu0 0.0
    %192 = vmatprep.subr.mxu0 0.0
    %193 = vmatpush1.xpose.msra.mxu0 0.0
    %194 = vmatprep.subr.mxu0 0.0
    %195 = vmatpush1.xpose.msra.mxu0 0.0
    %196 = vmatprep.subr.mxu0 0.0
    %197 = vmatpush1.xpose.msra.mxu0 0.0
    %198 = vmatprep.subr.mxu0 0.0
    %199 = vmatpush1.xpose.msra.mxu0 0.0
    %200 = vmatprep.subr.mxu0 0.0
    %201 = vmatpush1.xpose.msra.mxu0 0.0
    %202 = vmatprep.subr.mxu0 0.0
    %203 = vmatpush1.xpose.msra.mxu0 0.0
    %204 = vmatprep.subr.mxu0 0.0
    %205 = vmatpush1.xpose.msra.mxu0 0.0
    %206 = vmatprep.subr.mxu0 0.0
    %207 = vmatpush1.xpose.msra.mxu0 0.0
    %208 = vmatprep.subr.mxu0 0.0
    %209 = vmatpush1.xpose.msra.mxu0 0.0
    %210 = vmatprep.subr.mxu0 0.0
    %211 = vmatpush1.xpose.msra.mxu0 0.0
    %212 = vmatprep.subr.mxu0 0.0
    %213 = vmatpush1.xpose.msra.mxu0 0.0
    %214 = vmatprep.subr.mxu0 0.0
    %215 = vmatpush1.xpose.msra.mxu0 0.0
    %216 = vmatprep.subr.mxu0 0.0
    %217 = vmatpush1.xpose.msra.mxu0 0.0
    %218 = vmatprep.subr.mxu0 0.0
    %219 = vmatpush1.xpose.msra.mxu0 0.0
    %220 = vmatprep.subr.mxu0 0.0
    %221 = vmatpush1.xpose.msra.mxu0 0.0
    %222 = vmatprep.subr.mxu0 0.0
    %223 = vmatpush1.xpose.msra.mxu0 0.0
    %224 = vmatprep.subr.mxu0 0.0
    %225 = vmatpush1.xpose.msra.mxu0 0.0
    %226 = vmatprep.subr.mxu0 0.0
    %227 = vmatpush1.xpose.msra.mxu0 0.0
    %228 = vmatprep.subr.mxu0 0.0
    %229 = vmatpush1.xpose.msra.mxu0 0.0
    %230 = vmatprep.subr.mxu0 0.0
    %231 = vmatpush1.xpose.msra.mxu0 0.0
    %232 = vmatprep.subr.mxu0 0.0
    %233 = vmatpush1.xpose.msra.mxu0 0.0
    %234 = vmatprep.subr.mxu0 0.0
    %235 = vmatpush1.xpose.msra.mxu0 0.0
    %236 = vmatprep.mubr.f32.mxu0 0.0
    %237 = vmatmul.mubr.f32.gmra.mrb[0].mxu0 %v167
    %v238 = vpop.f32.mrb[0].mxu0
    %v239 = vadd.f32 0.0, %v238
    %v240 = vpop.f32.mrb[0].mxu0
    %241 = vdwg.mxu0
    %v242 = vlaneseq
    %v243 = vshrl.u32 %v242, 7
    %v244 = vlaneseq
    %v245 = vand.u32 %v244, 127
    %vm246 = vcmp.eq.s32.totalorder %v243, %v245
    %v247 = vsel %vm246, 1, 0
    %v248 = vcvt.s32.f32 %v247
    %v249 = vmul.f32 %v239, %v248
    %vm250 = vcmask 64512
    %v251 = vsel %vm250, %v249, 0.0
    %252 = vadd.xlane.f32.xlu0 %v251
    %v253 = vpop.xlane.xlu0 %252
    %v254 = vmul.f32 %v239, 1.442695
    %v255 = vpow.pop %v254
    %v256 = vsel %vm250, %v255, 0.0
    %257 = vadd.xlane.f32.xlu0 %v256
    %v258 = vpop.xlane.xlu0 %257
    %v259 = vlog2.pop %v258
    %v260 = vmul.f32 %v259, 0.6931472
    %v261 = vsub.f32 %v260, %v253
    %vm262 = vcmask 7168
    %v263 = vsel %vm262, %v261, 0.0
    %264 = vadd.xlane.f32.xlu0 %v263
    %v265 = vpop.xlane.xlu0 %264
    %v266 = vrot.slane %v265, 4
    %v267 = vadd.f32 %v265, %v266
    %v268 = vrot.slane %v267, 2
    %v269 = vadd.f32 %v267, %v268
    %v270 = vrot.slane %v269, 1
    %v271 = vadd.f32 %v269, %v270
    %s272 = vtos %v271
    %v273 = vrcp.pop 8.0
    %s274 = vtos %v273
    %s275 = smul.f32 %s272, %s274
    %s276 = scalar_lea.smem [#allocation8], 0
    %277 = sst [smem:[%s276]] %s275
    // Predicated region
    $region30: #{tpu_custom_call.1} parent=1 // pred_check
      _
    $region31: #{tpu_custom_call.1} parent=1 // pred_check_branch
      %279 = sbr.rel (0) target = $region33
    $region32: #{tpu_custom_call.1} parent=1 // pred_region
      %s281 = ssub.s32 16, 16
      %282 = vsyncadd [#allocation4], %s281
      %285 = dma.smem_to_hbm [#allocation8], 16, %s4, [#allocation4]
    $region33: #{tpu_custom_call.1} parent=1 // pred_fallthru
      _
    // Predicated region
    $region34: #{tpu_custom_call.1} parent=1 // pred_check
      _
    $region35: #{tpu_custom_call.1} parent=1 // pred_check_branch
      %287 = sbr.rel (0) target = $region37
    $region36: #{tpu_custom_call.1} parent=1 // pred_region
      %288 = dma.done [#allocation4], 16
    $region37: #{tpu_custom_call.1} parent=1 // pred_fallthru
      _
    %289 = sfence
    %290 = vsyncpa [#allocation3], 1
    %291 = vsyncpa [#allocation6], 1
    %292 = vsyncpa [#allocation4], 1

</llo_original>
